<compile_context>
chip_gen: v7x
topology: tpu7x:2x2x1
jax: 0.10.0
libtpu: 0.0.40
codegen_flags: <defaults>
</compile_context>

<pallas_src>
import jax
import jax.numpy as jnp
import numpy as np
from jax import lax
from jax.experimental import pallas as pl
from jax.experimental.pallas import tpu as pltpu


def dwconv_kernel(xc_ref, xt_ref, xb_ref, w_ref, b_ref, o_ref):
    """Depthwise 3x3 conv (stride 1, pad 1) on one (batch, row-strip).

    xc_ref: (1, TH, W, C)  row strip of the NHWC image
    xt_ref: (1, 1,  W, C)  row above the strip (clamped; masked when t == 0)
    xb_ref: (1, 1,  W, C)  row below the strip (clamped; masked when t == last)
    w_ref : (9, C)         depthwise taps, k = di*3 + dj (cross-correlation)
    b_ref : (1, C)         bias
    o_ref : (1, TH, W, C)  output strip
    """
    t = pl.program_id(1)
    nt = pl.num_programs(1)

    xc = xc_ref[0].astype(jnp.float32)            # (TH, W, C)
    TH, W, C = xc.shape
    R = TH + 2

    # Halo rows; zero them at the image border == the conv's zero padding.
    top = xt_ref[0].astype(jnp.float32)           # (1, W, C)
    bot = xb_ref[0].astype(jnp.float32)           # (1, W, C)
    top = top * jnp.where(t > 0, 1.0, 0.0)
    bot = bot * jnp.where(t < nt - 1, 1.0, 0.0)

    # Rows [-1 .. TH] of the strip (leading-dim concat, tile aligned).
    x_ext = jnp.concatenate([top, xc, bot], axis=0)          # (R, W, C)

    # +-1 column shifts: one sublane roll of the flattened (R*W, C) view (XLU),
    # then zero the columns that wrapped across the W edge.  The wrap mask is
    # built at (1, W, 1) and broadcast inside the select (cheap on the VALU).
    flat = x_ext.reshape(R * W, C)                # free when W % 8 == 0
    col = lax.broadcasted_iota(jnp.int32, (1, W, 1), 1)
    not_first = col >= 1                          # kill wrapped col 0
    not_last = col <= W - 2                       # kill wrapped col W-1
    x_wm1 = jnp.where(not_first,
                      pltpu.roll(flat, 1, axis=0).reshape(R, W, C), 0.0)
    x_wp1 = jnp.where(not_last,
                      pltpu.roll(flat, R * W - 1, axis=0).reshape(R, W, C), 0.0)

    # Depthwise taps, loaded once.
    w = w_ref[...].astype(jnp.float32)            # (9, C)
    taps = [w[k:k + 1, :].reshape(1, 1, C) for k in range(9)]

    # Start the accumulator at the bias (saves one full-size add at the end).
    acc = jnp.broadcast_to(b_ref[...].astype(jnp.float32).reshape(1, 1, C),
                           (TH, W, C))
    for di in range(3):                           # fully unrolled 3x3 taps
        rows = slice(di, di + TH)                 # row shift == leading offset
        acc = acc + x_wm1[rows] * taps[3 * di + 0]
        acc = acc + x_ext[rows] * taps[3 * di + 1]
        acc = acc + x_wp1[rows] * taps[3 * di + 2]

    o_ref[0] = acc.astype(o_ref.dtype)


def _pick_row_tile(H, W, C, itemsize, budget_bytes=4 << 20):
    """Largest divisor of H whose working set fits a modest VMEM budget;
    prefer >= 2 row tiles so the grid pipelines / shards across v7x's 2 TCs."""
    divisors = [d for d in range(1, H + 1) if H % d == 0]
    fitting = [d for d in divisors if d * W * C * itemsize * 6 <= budget_bytes] or [1]
    non_full = [d for d in fitting if d < H] or fitting
    return max(non_full)


def dwconv_pallas(x, w, b, H, W, *, row_tile=None):
    """x: (B, N, C) with N == H*W; w: (3, 3, C) depthwise taps; b: (C,)."""
    B, N, C = x.shape
    assert N == H * W, "N must equal H*W"

    if row_tile is None:
        row_tile = _pick_row_tile(H, W, C, np.dtype(x.dtype).itemsize)
    TH = int(row_tile)
    assert H % TH == 0, "row_tile must divide H"
    nt = H // TH

    x_img = x.reshape(B, H, W, C)                 # free reshape, C stays on lanes
    w9 = w.reshape(9, C)
    b1 = b.reshape(1, C)

    grid_spec = pltpu.PrefetchScalarGridSpec(
        num_scalar_prefetch=0,
        grid=(B, nt),
        in_specs=[
            # TH-row strip
            pl.BlockSpec((1, TH, W, C), lambda bb, t: (bb, t, 0, 0)),
            # 1-row top halo (clamped at the border; kernel masks t == 0)
            pl.BlockSpec((1, 1, W, C),
                         lambda bb, t: (bb, jnp.maximum(t * TH - 1, 0), 0, 0)),
            # 1-row bottom halo (clamped; kernel masks t == nt - 1)
            pl.BlockSpec((1, 1, W, C),
                         lambda bb, t: (bb, jnp.minimum(t * TH + TH, H - 1), 0, 0)),
            pl.BlockSpec((9, C), lambda bb, t: (0, 0)),   # depthwise taps
            pl.BlockSpec((1, C), lambda bb, t: (0, 0)),   # bias
        ],
        out_specs=pl.BlockSpec((1, TH, W, C), lambda bb, t: (bb, t, 0, 0)),
    )

    out = pl.pallas_call(
        dwconv_kernel,
        out_shape=jax.ShapeDtypeStruct((B, H, W, C), x.dtype),
        grid_spec=grid_spec,
        compiler_params=pltpu.CompilerParams(
            dimension_semantics=("parallel", "parallel")),
    )(x_img, x_img, x_img, w9, b1)

    return out.reshape(B, N, C)


def dwconv_ref(x, w, b, H, W):
    """Pure-JAX reference (same math as the PyTorch DWConv module)."""
    B, N, C = x.shape
    img = x.reshape(B, H, W, C)
    kern = w.reshape(3, 3, 1, C)                  # HWIO, depthwise
    out = lax.conv_general_dilated(
        img, kern, window_strides=(1, 1), padding="SAME",
        dimension_numbers=("NHWC", "HWIO", "NHWC"),
        feature_group_count=C) + b
    return out.reshape(B, N, C)


if __name__ == "__main__":
    B, H, W, C = 2, 16, 16, 128                   # small, lane-dense (C = 128)
    N = H * W

    key = jax.random.PRNGKey(0)
    k0, k1, k2 = jax.random.split(key, 3)
    x = jax.random.normal(k0, (B, N, C), jnp.float32)
    w = jax.random.normal(k1, (3, 3, C), jnp.float32) * (1.0 / 3.0)
    b = jax.random.normal(k2, (C,), jnp.float32) * 0.01

    out = dwconv_pallas(x, w, b, H, W)            # picks TH=8 -> grid (2, 2)
    out = jax.block_until_ready(out)

    ref = dwconv_ref(x, w, b, H, W)
    np.testing.assert_allclose(np.asarray(out), np.asarray(ref),
                               rtol=1e-4, atol=1e-4)
    print("KERNEL_OK")
</pallas_src>

<mosaic_0001>
module attributes {stable_mosaic.version = 11 : i64} {
  func.func @dwconv_kernel(%arg0: i32, %arg1: i32, %arg2: memref<1x8x16x128xf32, #tpu.memory_space<vmem>>, %arg3: memref<1x1x16x128xf32, #tpu.memory_space<vmem>>, %arg4: memref<1x1x16x128xf32, #tpu.memory_space<vmem>>, %arg5: memref<9x128xf32, #tpu.memory_space<vmem>>, %arg6: memref<1x128xf32, #tpu.memory_space<vmem>>, %arg7: memref<1x8x16x128xf32, #tpu.memory_space<vmem>>) attributes {dimension_semantics = [#tpu.dimension_semantics<parallel>, #tpu.dimension_semantics<parallel>], iteration_bounds = array<i64: 2, 2>, scalar_prefetch = 0 : i64, scratch_operands = 0 : i64, tpu.core_type = #tpu.core_type<tc>, window_params = [{transform_indices = @transform_0, window_bounds = array<i64: 1, 8, 16, 128>}, {transform_indices = @transform_1, window_bounds = array<i64: 1, 1, 16, 128>}, {transform_indices = @transform_2, window_bounds = array<i64: 1, 1, 16, 128>}, {pipeline_mode = #tpu.pipeline_mode<synchronous>, transform_indices = @transform_3, window_bounds = array<i64: 9, 128>}, {pipeline_mode = #tpu.pipeline_mode<synchronous>, transform_indices = @transform_4, window_bounds = array<i64: 1, 128>}, {transform_indices = @transform_5, window_bounds = array<i64: 1, 8, 16, 128>}]} {
    %c0 = arith.constant 0 : index
    %c0_0 = arith.constant 0 : index
    %c0_1 = arith.constant 0 : index
    %c0_2 = arith.constant 0 : index
    %0 = vector.load %arg2[%c0, %c0_0, %c0_1, %c0_2] : memref<1x8x16x128xf32, #tpu.memory_space<vmem>>, vector<1x8x16x128xf32>
    %1 = vector.shape_cast %0 : vector<1x8x16x128xf32> to vector<8x16x128xf32>
    %c0_3 = arith.constant 0 : index
    %c0_4 = arith.constant 0 : index
    %c0_5 = arith.constant 0 : index
    %c0_6 = arith.constant 0 : index
    %2 = vector.load %arg3[%c0_3, %c0_4, %c0_5, %c0_6] : memref<1x1x16x128xf32, #tpu.memory_space<vmem>>, vector<1x1x16x128xf32>
    %3 = vector.shape_cast %2 : vector<1x1x16x128xf32> to vector<1x16x128xf32>
    %c0_7 = arith.constant 0 : index
    %c0_8 = arith.constant 0 : index
    %c0_9 = arith.constant 0 : index
    %c0_10 = arith.constant 0 : index
    %4 = vector.load %arg4[%c0_7, %c0_8, %c0_9, %c0_10] : memref<1x1x16x128xf32, #tpu.memory_space<vmem>>, vector<1x1x16x128xf32>
    %5 = vector.shape_cast %4 : vector<1x1x16x128xf32> to vector<1x16x128xf32>
    %c0_i32 = arith.constant 0 : i32
    %6 = arith.cmpi sgt, %arg1, %c0_i32 : i32
    %cst = arith.constant 1.000000e+00 : f32
    %cst_11 = arith.constant 0.000000e+00 : f32
    %7 = arith.select %6, %cst, %cst_11 : f32
    %8 = vector.broadcast %7 : f32 to vector<1x16x128xf32>
    %9 = arith.mulf %3, %8 : vector<1x16x128xf32>
    %c1_i32 = arith.constant 1 : i32
    %10 = arith.cmpi slt, %arg1, %c1_i32 : i32
    %cst_12 = arith.constant 1.000000e+00 : f32
    %cst_13 = arith.constant 0.000000e+00 : f32
    %11 = arith.select %10, %cst_12, %cst_13 : f32
    %12 = vector.broadcast %11 : f32 to vector<1x16x128xf32>
    %13 = arith.mulf %5, %12 : vector<1x16x128xf32>
    %14 = tpu.concatenate %9, %1, %13 in 0 : vector<1x16x128xf32>, vector<8x16x128xf32>, vector<1x16x128xf32> -> vector<10x16x128xf32>
    %15 = vector.shape_cast %14 : vector<10x16x128xf32> to vector<160x128xf32>
    %16 = tpu.iota {dimensions = array<i32: 1>} : vector<1x16x1xi32>
    %c1_i32_14 = arith.constant 1 : i32
    %17 = vector.broadcast %c1_i32_14 : i32 to vector<1x16x1xi32>
    %18 = arith.cmpi sge, %16, %17 : vector<1x16x1xi32>
    %c14_i32 = arith.constant 14 : i32
    %19 = vector.broadcast %c14_i32 : i32 to vector<1x16x1xi32>
    %20 = arith.cmpi sle, %16, %19 : vector<1x16x1xi32>
    %c1_i32_15 = arith.constant 1 : i32
    %21 = tpu.dynamic_rotate %15 by %c1_i32_15 dim 0 : vector<160x128xf32>, i32 -> vector<160x128xf32>
    %22 = vector.shape_cast %21 : vector<160x128xf32> to vector<10x16x128xf32>
    %cst_16 = arith.constant 0.000000e+00 : f32
    %23 = vector.shape_cast %18 : vector<1x16x1xi1> to vector<1x16x1xi1>
    %24 = vector.broadcast %23 : vector<1x16x1xi1> to vector<10x16x128xi1>
    %25 = vector.broadcast %cst_16 : f32 to vector<10x16x128xf32>
    %26 = arith.select %24, %22, %25 : vector<10x16x128xi1>, vector<10x16x128xf32>
    %c159_i32 = arith.constant 159 : i32
    %27 = tpu.dynamic_rotate %15 by %c159_i32 dim 0 : vector<160x128xf32>, i32 -> vector<160x128xf32>
    %28 = vector.shape_cast %27 : vector<160x128xf32> to vector<10x16x128xf32>
    %cst_17 = arith.constant 0.000000e+00 : f32
    %29 = vector.shape_cast %20 : vector<1x16x1xi1> to vector<1x16x1xi1>
    %30 = vector.broadcast %29 : vector<1x16x1xi1> to vector<10x16x128xi1>
    %31 = vector.broadcast %cst_17 : f32 to vector<10x16x128xf32>
    %32 = arith.select %30, %28, %31 : vector<10x16x128xi1>, vector<10x16x128xf32>
    %c0_18 = arith.constant 0 : index
    %c0_19 = arith.constant 0 : index
    %33 = vector.load %arg5[%c0_18, %c0_19] : memref<9x128xf32, #tpu.memory_space<vmem>>, vector<9x128xf32>
    %34 = vector.extract_strided_slice %33 {offsets = [0, 0], sizes = [1, 128], strides = [1, 1]} : vector<9x128xf32> to vector<1x128xf32>
    %35 = vector.shape_cast %34 : vector<1x128xf32> to vector<1x1x128xf32>
    %36 = vector.extract_strided_slice %33 {offsets = [1, 0], sizes = [1, 128], strides = [1, 1]} : vector<9x128xf32> to vector<1x128xf32>
    %37 = vector.shape_cast %36 : vector<1x128xf32> to vector<1x1x128xf32>
    %38 = vector.extract_strided_slice %33 {offsets = [2, 0], sizes = [1, 128], strides = [1, 1]} : vector<9x128xf32> to vector<1x128xf32>
    %39 = vector.shape_cast %38 : vector<1x128xf32> to vector<1x1x128xf32>
    %40 = vector.extract_strided_slice %33 {offsets = [3, 0], sizes = [1, 128], strides = [1, 1]} : vector<9x128xf32> to vector<1x128xf32>
    %41 = vector.shape_cast %40 : vector<1x128xf32> to vector<1x1x128xf32>
    %42 = vector.extract_strided_slice %33 {offsets = [4, 0], sizes = [1, 128], strides = [1, 1]} : vector<9x128xf32> to vector<1x128xf32>
    %43 = vector.shape_cast %42 : vector<1x128xf32> to vector<1x1x128xf32>
    %44 = vector.extract_strided_slice %33 {offsets = [5, 0], sizes = [1, 128], strides = [1, 1]} : vector<9x128xf32> to vector<1x128xf32>
    %45 = vector.shape_cast %44 : vector<1x128xf32> to vector<1x1x128xf32>
    %46 = vector.extract_strided_slice %33 {offsets = [6, 0], sizes = [1, 128], strides = [1, 1]} : vector<9x128xf32> to vector<1x128xf32>
    %47 = vector.shape_cast %46 : vector<1x128xf32> to vector<1x1x128xf32>
    %48 = vector.extract_strided_slice %33 {offsets = [7, 0], sizes = [1, 128], strides = [1, 1]} : vector<9x128xf32> to vector<1x128xf32>
    %49 = vector.shape_cast %48 : vector<1x128xf32> to vector<1x1x128xf32>
    %50 = vector.extract_strided_slice %33 {offsets = [8, 0], sizes = [1, 128], strides = [1, 1]} : vector<9x128xf32> to vector<1x128xf32>
    %51 = vector.shape_cast %50 : vector<1x128xf32> to vector<1x1x128xf32>
    %c0_20 = arith.constant 0 : index
    %c0_21 = arith.constant 0 : index
    %52 = vector.load %arg6[%c0_20, %c0_21] : memref<1x128xf32, #tpu.memory_space<vmem>>, vector<1x128xf32>
    %53 = vector.shape_cast %52 : vector<1x128xf32> to vector<1x1x128xf32>
    %54 = vector.shape_cast %53 : vector<1x1x128xf32> to vector<1x1x128xf32>
    %55 = vector.broadcast %54 : vector<1x1x128xf32> to vector<8x16x128xf32>
    %56 = vector.extract_strided_slice %26 {offsets = [0, 0, 0], sizes = [8, 16, 128], strides = [1, 1, 1]} : vector<10x16x128xf32> to vector<8x16x128xf32>
    %57 = vector.broadcast %35 : vector<1x1x128xf32> to vector<8x16x128xf32>
    %58 = arith.mulf %56, %57 : vector<8x16x128xf32>
    %59 = arith.addf %55, %58 : vector<8x16x128xf32>
    %60 = vector.extract_strided_slice %14 {offsets = [0, 0, 0], sizes = [8, 16, 128], strides = [1, 1, 1]} : vector<10x16x128xf32> to vector<8x16x128xf32>
    %61 = vector.broadcast %37 : vector<1x1x128xf32> to vector<8x16x128xf32>
    %62 = arith.mulf %60, %61 : vector<8x16x128xf32>
    %63 = arith.addf %59, %62 : vector<8x16x128xf32>
    %64 = vector.extract_strided_slice %32 {offsets = [0, 0, 0], sizes = [8, 16, 128], strides = [1, 1, 1]} : vector<10x16x128xf32> to vector<8x16x128xf32>
    %65 = vector.broadcast %39 : vector<1x1x128xf32> to vector<8x16x128xf32>
    %66 = arith.mulf %64, %65 : vector<8x16x128xf32>
    %67 = arith.addf %63, %66 : vector<8x16x128xf32>
    %68 = vector.extract_strided_slice %26 {offsets = [1, 0, 0], sizes = [8, 16, 128], strides = [1, 1, 1]} : vector<10x16x128xf32> to vector<8x16x128xf32>
    %69 = vector.broadcast %41 : vector<1x1x128xf32> to vector<8x16x128xf32>
    %70 = arith.mulf %68, %69 : vector<8x16x128xf32>
    %71 = arith.addf %67, %70 : vector<8x16x128xf32>
    %72 = vector.extract_strided_slice %14 {offsets = [1, 0, 0], sizes = [8, 16, 128], strides = [1, 1, 1]} : vector<10x16x128xf32> to vector<8x16x128xf32>
    %73 = vector.broadcast %43 : vector<1x1x128xf32> to vector<8x16x128xf32>
    %74 = arith.mulf %72, %73 : vector<8x16x128xf32>
    %75 = arith.addf %71, %74 : vector<8x16x128xf32>
    %76 = vector.extract_strided_slice %32 {offsets = [1, 0, 0], sizes = [8, 16, 128], strides = [1, 1, 1]} : vector<10x16x128xf32> to vector<8x16x128xf32>
    %77 = vector.broadcast %45 : vector<1x1x128xf32> to vector<8x16x128xf32>
    %78 = arith.mulf %76, %77 : vector<8x16x128xf32>
    %79 = arith.addf %75, %78 : vector<8x16x128xf32>
    %80 = vector.extract_strided_slice %26 {offsets = [2, 0, 0], sizes = [8, 16, 128], strides = [1, 1, 1]} : vector<10x16x128xf32> to vector<8x16x128xf32>
    %81 = vector.broadcast %47 : vector<1x1x128xf32> to vector<8x16x128xf32>
    %82 = arith.mulf %80, %81 : vector<8x16x128xf32>
    %83 = arith.addf %79, %82 : vector<8x16x128xf32>
    %84 = vector.extract_strided_slice %14 {offsets = [2, 0, 0], sizes = [8, 16, 128], strides = [1, 1, 1]} : vector<10x16x128xf32> to vector<8x16x128xf32>
    %85 = vector.broadcast %49 : vector<1x1x128xf32> to vector<8x16x128xf32>
    %86 = arith.mulf %84, %85 : vector<8x16x128xf32>
    %87 = arith.addf %83, %86 : vector<8x16x128xf32>
    %88 = vector.extract_strided_slice %32 {offsets = [2, 0, 0], sizes = [8, 16, 128], strides = [1, 1, 1]} : vector<10x16x128xf32> to vector<8x16x128xf32>
    %89 = vector.broadcast %51 : vector<1x1x128xf32> to vector<8x16x128xf32>
    %90 = arith.mulf %88, %89 : vector<8x16x128xf32>
    %91 = arith.addf %87, %90 : vector<8x16x128xf32>
    %c0_22 = arith.constant 0 : index
    %c0_23 = arith.constant 0 : index
    %c0_24 = arith.constant 0 : index
    %c0_25 = arith.constant 0 : index
    %92 = vector.load %arg7[%c0_22, %c0_23, %c0_24, %c0_25] : memref<1x8x16x128xf32, #tpu.memory_space<vmem>>, vector<1x8x16x128xf32>
    %93 = vector.shape_cast %92 : vector<1x8x16x128xf32> to vector<8x16x128xf32>
    %94 = vector.shape_cast %91 : vector<8x16x128xf32> to vector<1x8x16x128xf32>
    tpu.vector_store %arg7[%c0_22, %c0_23, %c0_24, %c0_25], %94 {strides = array<i32>} : memref<1x8x16x128xf32, #tpu.memory_space<vmem>>, vector<1x8x16x128xf32>,
    return
  }
  func.func @transform_0(%arg0: i32, %arg1: i32) -> (i32, i32, i32, i32) {
    %c0_i32 = arith.constant 0 : i32
    %c0_i32_0 = arith.constant 0 : i32
    %c0_i32_1 = arith.constant 0 : i32
    return %arg0, %arg1, %c0_i32, %c0_i32_0 : i32, i32, i32, i32
  }
  func.func @transform_1(%arg0: i32, %arg1: i32) -> (i32, i32, i32, i32) {
    %c8_i32 = arith.constant 8 : i32
    %0 = arith.muli %arg1, %c8_i32 : i32
    %c1_i32 = arith.constant 1 : i32
    %1 = arith.subi %0, %c1_i32 : i32
    %c0_i32 = arith.constant 0 : i32
    %2 = arith.maxsi %1, %c0_i32 : i32
    %c0_i32_0 = arith.constant 0 : i32
    %c0_i32_1 = arith.constant 0 : i32
    %c0_i32_2 = arith.constant 0 : i32
    return %arg0, %2, %c0_i32_0, %c0_i32_1 : i32, i32, i32, i32
  }
  func.func @transform_2(%arg0: i32, %arg1: i32) -> (i32, i32, i32, i32) {
    %c8_i32 = arith.constant 8 : i32
    %0 = arith.muli %arg1, %c8_i32 : i32
    %c8_i32_0 = arith.constant 8 : i32
    %1 = arith.addi %0, %c8_i32_0 : i32
    %c15_i32 = arith.constant 15 : i32
    %2 = arith.minsi %1, %c15_i32 : i32
    %c0_i32 = arith.constant 0 : i32
    %c0_i32_1 = arith.constant 0 : i32
    %c0_i32_2 = arith.constant 0 : i32
    return %arg0, %2, %c0_i32, %c0_i32_1 : i32, i32, i32, i32
  }
  func.func @transform_3(%arg0: i32, %arg1: i32) -> (i32, i32) {
    %c0_i32 = arith.constant 0 : i32
    %c0_i32_0 = arith.constant 0 : i32
    %c0_i32_1 = arith.constant 0 : i32
    return %c0_i32, %c0_i32_0 : i32, i32
  }
  func.func @transform_4(%arg0: i32, %arg1: i32) -> (i32, i32) {
    %c0_i32 = arith.constant 0 : i32
    %c0_i32_0 = arith.constant 0 : i32
    %c0_i32_1 = arith.constant 0 : i32
    return %c0_i32, %c0_i32_0 : i32, i32
  }
  func.func @transform_5(%arg0: i32, %arg1: i32) -> (i32, i32, i32, i32) {
    %c0_i32 = arith.constant 0 : i32
    %c0_i32_0 = arith.constant 0 : i32
    %c0_i32_1 = arith.constant 0 : i32
    return %arg0, %arg1, %c0_i32, %c0_i32_0 : i32, i32, i32, i32
  }
}

</mosaic_0001>

<llo_original>
// kernel: tpu_custom_call.1
$region0: #{tpu_custom_call.1}
  #allocation0 [shape = 'u32[]', space=smem, size = 0x4, offset = 0x4, fixed_abs, tag = 'smem constant byte address 0x4 - core index']
  #allocation1 [shape = 'u32[144,128]{1,0:T(1,128)}', space=vmem, size = 0x12000, scoped, tag = 'internal scratch']
  %s0 = inlined_call_operand.hbm [shape: f32[2,16,16,128], index: 0, kind: input, shape index: {}]
  %s1 = inlined_call_operand.hbm [shape: f32[2,16,16,128], index: 1, kind: input, shape index: {}]
  %s2 = inlined_call_operand.hbm [shape: f32[2,16,16,128], index: 2, kind: input, shape index: {}]
  %s3 = inlined_call_operand.hbm [shape: f32[9,128], index: 3, kind: input, shape index: {}]
  %s4 = inlined_call_operand.vmem [shape: f32[1,128], index: 4, kind: input, shape index: {}]
  %s5 = inlined_call_operand.hbm [shape: f32[2,16,16,128], index: 5, kind: output, shape index: {}]
  %s6 = sld [smem:[#allocation0]]
  $region69: #{tpu_custom_call.1} parent=0
    _
  %s8 = ssub.s32 1, %s6
  %s9 = scalar_select 0, %s8, %s6
  $region1: #{tpu_custom_call.1} parent=0
    #allocation2 [shape = 'u8[131072]{0}', space=vmem, size = 0x20000, scoped, tag = 'input window, operand 0']
    #allocation3 [shape = 's32[2]{0}', space=sflag, size = 0x8, scoped, tag = 'scoped memory for tpu_custom_call.1']
    #allocation4 [shape = 's32[2]{0}', space=sflag, size = 0x8, scoped, tag = 'scoped memory for tpu_custom_call.1']
    #allocation5 [shape = 'u8[16384]{0}', space=vmem, size = 0x4000, scoped, tag = 'input window, operand 1']
    #allocation6 [shape = 's32[2]{0}', space=sflag, size = 0x8, scoped, tag = 'scoped memory for tpu_custom_call.1']
    #allocation7 [shape = 'u8[16384]{0}', space=vmem, size = 0x4000, scoped, tag = 'input window, operand 2']
    #allocation8 [shape = 'u8[8192]{0}', space=vmem, size = 0x2000, scoped, tag = 'input window, operand 3, single buffered']
    #allocation9 [shape = 's32[1]{0}', space=sflag, size = 0x4, scoped, tag = 'scoped memory for tpu_custom_call.1']
    #allocation10 [shape = 'u8[131072]{0}', space=vmem, size = 0x20000, scoped, tag = 'output window, operand 0']
    %10 = vsyncpa [#allocation3], 0
    %s11 = scalar_lea.sflag [#allocation3], 1
    %12 = vsyncpa %s11, 0
    %13 = vsyncpa [#allocation6], 0
    %s14 = scalar_lea.sflag [#allocation6], 1
    %15 = vsyncpa %s14, 0
    %16 = vsyncpa [#allocation9], 0
    %17 = vsyncpa [#allocation4], 0
    %s18 = scalar_lea.sflag [#allocation4], 1
    %19 = vsyncpa %s18, 0
    loop: start=0, step=1, limit=6
    $region2: #{tpu_custom_call.1} parent=1 // loop_pre_header
      _
    $region3: #{tpu_custom_call.1} parent=1 // loop_header
      %s21 = sphi 0, %s25
      %p22 = scmp.ge.s32.totalorder %s21, 6
      %s28 = sphi 0, %s40
      %s29 = sphi 0, %s36
      %s30 = sphi 0, %s28
      %s31 = sphi 0, %s29
      %s32 = sphi 0, %s30
      %s33 = sphi 0, %s31
      %s45 = sphi 0, %s47
      %s48 = sphi 0, %s45
      %s49 = sphi 0, %s48
      %s65 = sphi 0, %s49
      %s81 = sphi 0, %s83
      %s84 = sphi 0, %s81
      %s85 = sphi 0, %s84
      %s101 = sphi 0, %s85
      %s117 = sphi 0, %s119
      %s120 = sphi 0, %s117
      %s121 = sphi 0, %s120
      %s137 = sphi 0, %s121
      %s141 = sphi 0, %s141
      %s143 = sphi 0, %s141
      %s144 = sphi 0, %s143
      %s158 = sphi 0, %s144
      %s162 = sphi 0, %s162
      %s164 = sphi 0, %s162
      %s165 = sphi 0, %s164
      %s179 = sphi 0, %s165
      %s187 = sphi 0, %s189
      %s190 = sphi 0, %s187
      %s191 = sphi 0, %s190
      %s207 = sphi 0, %s191
    $region4: #{tpu_custom_call.1} parent=1 // loop_header_branch
      %24 = sbr.rel (%p22) target = $region8
    $region5: #{tpu_custom_call.1} parent=1 // loop_body
      %s26 = ssub.s32 %s21, 1
      %s27 = ssub.s32 %s21, 2
      %s34 = sadd.s32 1, %s29
      %p35 = scmp.ge.s32.totalorder %s34, 2
      %s36 = scalar_select %p35, 0, %s34
      %s37 = sadd.s32 1, %s28
      %s38 = scalar_select %p35, %s37, %s28
      %p39 = scmp.ge.s32.totalorder %s38, 2
      %s40 = scalar_select %p39, 0, %s38
      %s41 = ssub.s32 %s28, %s40
      %s42 = ssub.s32 %s29, %s36
      %s43 = sor.u32 %s41, %s42
      %p44 = scmp.eq.s32.totalorder %s43, 0
      %s46 = sadd.s32 %s45, 1
      %s47 = scalar_select %p44, %s45, %s46
      %p50 = pneg %p44
      %p51 = scmp.eq.s32.totalorder %s21, 3
      %p52 = por %p50, %p51
      %p53 = scmp.ne.s32.totalorder %s45, %s48
      %p54 = scmp.eq.s32.totalorder %s21, 0
      %p55 = por %p53, %p54
      %p56 = scmp.ne.s32.totalorder %s45, %s48
      %p57 = scmp.eq.s32.totalorder %s26, 3
      %p58 = por %p56, %p57
      %p59 = scmp.ne.s32.totalorder %s48, %s49
      %p60 = scmp.eq.s32.totalorder %s26, 0
      %p61 = por %p59, %p60
      %p62 = scmp.ne.s32.totalorder %s48, %s49
      %p63 = scmp.eq.s32.totalorder %s27, 3
      %p64 = por %p62, %p63
      %p66 = scmp.ne.s32.totalorder %s49, %s65
      %p67 = scmp.eq.s32.totalorder %s27, 0
      %p68 = por %p66, %p67
      %s69 = smul.u32 %s29, 8
      %s70 = ssub.s32 %s69, 1
      %p71 = scmp.gt.s32.totalorder %s70, 0
      %s72 = scalar_select %p71, %s70, 0
      %s73 = smul.u32 %s36, 8
      %s74 = ssub.s32 %s73, 1
      %p75 = scmp.gt.s32.totalorder %s74, 0
      %s76 = scalar_select %p75, %s74, 0
      %s77 = ssub.s32 %s28, %s40
      %s78 = ssub.s32 %s72, %s76
      %s79 = sor.u32 %s77, %s78
      %p80 = scmp.eq.s32.totalorder %s79, 0
      %s82 = sadd.s32 %s81, 1
      %s83 = scalar_select %p80, %s81, %s82
      %p86 = pneg %p80
      %p87 = scmp.eq.s32.totalorder %s21, 3
      %p88 = por %p86, %p87
      %p89 = scmp.ne.s32.totalorder %s81, %s84
      %p90 = scmp.eq.s32.totalorder %s21, 0
      %p91 = por %p89, %p90
      %p92 = scmp.ne.s32.totalorder %s81, %s84
      %p93 = scmp.eq.s32.totalorder %s26, 3
      %p94 = por %p92, %p93
      %p95 = scmp.ne.s32.totalorder %s84, %s85
      %p96 = scmp.eq.s32.totalorder %s26, 0
      %p97 = por %p95, %p96
      %p98 = scmp.ne.s32.totalorder %s84, %s85
      %p99 = scmp.eq.s32.totalorder %s27, 3
      %p100 = por %p98, %p99
      %p102 = scmp.ne.s32.totalorder %s85, %s101
      %p103 = scmp.eq.s32.totalorder %s27, 0
      %p104 = por %p102, %p103
      %s105 = smul.u32 %s29, 8
      %s106 = sadd.s32 %s105, 8
      %p107 = scmp.lt.s32.totalorder %s106, 15
      %s108 = scalar_select %p107, %s106, 15
      %s109 = smul.u32 %s36, 8
      %s110 = sadd.s32 %s109, 8
      %p111 = scmp.lt.s32.totalorder %s110, 15
      %s112 = scalar_select %p111, %s110, 15
      %s113 = ssub.s32 %s28, %s40
      %s114 = ssub.s32 %s108, %s112
      %s115 = sor.u32 %s113, %s114
      %p116 = scmp.eq.s32.totalorder %s115, 0
      %s118 = sadd.s32 %s117, 1
      %s119 = scalar_select %p116, %s117, %s118
      %p122 = pneg %p116
      %p123 = scmp.eq.s32.totalorder %s21, 3
      %p124 = por %p122, %p123
      %p125 = scmp.ne.s32.totalorder %s117, %s120
      %p126 = scmp.eq.s32.totalorder %s21, 0
      %p127 = por %p125, %p126
      %p128 = scmp.ne.s32.totalorder %s117, %s120
      %p129 = scmp.eq.s32.totalorder %s26, 3
      %p130 = por %p128, %p129
      %p131 = scmp.ne.s32.totalorder %s120, %s121
      %p132 = scmp.eq.s32.totalorder %s26, 0
      %p133 = por %p131, %p132
      %p134 = scmp.ne.s32.totalorder %s120, %s121
      %p135 = scmp.eq.s32.totalorder %s27, 3
      %p136 = por %p134, %p135
      %p138 = scmp.ne.s32.totalorder %s121, %s137
      %p139 = scmp.eq.s32.totalorder %s27, 0
      %p140 = por %p138, %p139
      %s142 = sadd.s32 %s141, 1
      %p145 = scmp.eq.s32.totalorder %s21, 3
      %p146 = scmp.ne.s32.totalorder %s141, %s143
      %p147 = scmp.eq.s32.totalorder %s21, 0
      %p148 = por %p146, %p147
      %p149 = scmp.ne.s32.totalorder %s141, %s143
      %p150 = scmp.eq.s32.totalorder %s26, 3
      %p151 = por %p149, %p150
      %p152 = scmp.ne.s32.totalorder %s143, %s144
      %p153 = scmp.eq.s32.totalorder %s26, 0
      %p154 = por %p152, %p153
      %p155 = scmp.ne.s32.totalorder %s143, %s144
      %p156 = scmp.eq.s32.totalorder %s27, 3
      %p157 = por %p155, %p156
      %p159 = scmp.ne.s32.totalorder %s144, %s158
      %p160 = scmp.eq.s32.totalorder %s27, 0
      %p161 = por %p159, %p160
      %s163 = sadd.s32 %s162, 1
      %p166 = scmp.eq.s32.totalorder %s21, 3
      %p167 = scmp.ne.s32.totalorder %s162, %s164
      %p168 = scmp.eq.s32.totalorder %s21, 0
      %p169 = por %p167, %p168
      %p170 = scmp.ne.s32.totalorder %s162, %s164
      %p171 = scmp.eq.s32.totalorder %s26, 3
      %p172 = por %p170, %p171
      %p173 = scmp.ne.s32.totalorder %s164, %s165
      %p174 = scmp.eq.s32.totalorder %s26, 0
      %p175 = por %p173, %p174
      %p176 = scmp.ne.s32.totalorder %s164, %s165
      %p177 = scmp.eq.s32.totalorder %s27, 3
      %p178 = por %p176, %p177
      %p180 = scmp.ne.s32.totalorder %s165, %s179
      %p181 = scmp.eq.s32.totalorder %s27, 0
      %p182 = por %p180, %p181
      %s183 = ssub.s32 %s28, %s40
      %s184 = ssub.s32 %s29, %s36
      %s185 = sor.u32 %s183, %s184
      %p186 = scmp.eq.s32.totalorder %s185, 0
      %s188 = sadd.s32 %s187, 1
      %s189 = scalar_select %p186, %s187, %s188
      %p192 = pneg %p186
      %p193 = scmp.eq.s32.totalorder %s21, 3
      %p194 = por %p192, %p193
      %p195 = scmp.ne.s32.totalorder %s187, %s190
      %p196 = scmp.eq.s32.totalorder %s21, 0
      %p197 = por %p195, %p196
      %p198 = scmp.ne.s32.totalorder %s187, %s190
      %p199 = scmp.eq.s32.totalorder %s26, 3
      %p200 = por %p198, %p199
      %p201 = scmp.ne.s32.totalorder %s190, %s191
      %p202 = scmp.eq.s32.totalorder %s26, 0
      %p203 = por %p201, %p202
      %p204 = scmp.ne.s32.totalorder %s190, %s191
      %p205 = scmp.eq.s32.totalorder %s27, 3
      %p206 = por %p204, %p205
      %p208 = scmp.ne.s32.totalorder %s191, %s207
      %p209 = scmp.eq.s32.totalorder %s27, 0
      %p210 = por %p208, %p209
      %p211 = scmp.le.s32.totalorder 1, %s21
      %p212 = scmp.lt.s32.totalorder %s21, 5
      %p213 = pnand %p211, %p212
      %p214 = pneg %p213
      // Predicated region
      $region9: #{tpu_custom_call.1} parent=5 // pred_check
        _
      $region10: #{tpu_custom_call.1} parent=5 // pred_check_branch
        %216 = sbr.rel (%p213) target = $region12
      $region11: #{tpu_custom_call.1} parent=5 // pred_region
        %s217 = ssub.s32 %s21, 1
        // Predicated region
        $region13: #{tpu_custom_call.1} parent=11 // pred_check
          %p218 = pneg %p154
        $region14: #{tpu_custom_call.1} parent=11 // pred_check_branch
          %220 = sbr.rel (%p218) target = $region16
        $region15: #{tpu_custom_call.1} parent=11 // pred_region
          %s222 = ssub.s32 256, 256
          %223 = vsyncadd [#allocation9], %s222
          %s224 = sshll.u32 [#allocation8], 4
          %s225 = int_to_ptr.vmem [resolvable:$true] %s224
          %230 = dma.hbm_to_vmem [thread:$0]  %s3, 256, %s225, [#allocation9], 128, 128, 8
        $region16: #{tpu_custom_call.1} parent=11 // pred_fallthru
          _
        // Predicated region
        $region17: #{tpu_custom_call.1} parent=11 // pred_check
          %p231 = pneg %p175
        $region18: #{tpu_custom_call.1} parent=11 // pred_check_branch
          %233 = sbr.rel (%p231) target = $region20
        $region19: #{tpu_custom_call.1} parent=11 // pred_region
          _
        $region20: #{tpu_custom_call.1} parent=11 // pred_fallthru
          _
      $region12: #{tpu_custom_call.1} parent=5 // pred_fallthru
        _
      %p234 = scmp.lt.s32.totalorder %s21, 4
      // Predicated region
      $region21: #{tpu_custom_call.1} parent=5 // pred_check
        %p235 = pneg %p234
      $region22: #{tpu_custom_call.1} parent=5 // pred_check_branch
        %237 = sbr.rel (%p235) target = $region24
      $region23: #{tpu_custom_call.1} parent=5 // pred_region
        // Predicated region
        $region25: #{tpu_custom_call.1} parent=23 // pred_check
          %p238 = pneg %p55
        $region26: #{tpu_custom_call.1} parent=23 // pred_check_branch
          %240 = sbr.rel (%p238) target = $region28
        $region27: #{tpu_custom_call.1} parent=23 // pred_region
          %s241 = sand.u32 %s45, 1
          %s242 = scalar_lea.sflag [#allocation3], %s241
          %s243 = sand.u32 %s45, 1
          %s244 = smul.addr %s243, 128
          %s245 = scalar_lea.vmem [#allocation2], %s244
          %s246 = smul.u32 8, %s29
          %s248 = ssub.s32 2048, 2048
          %249 = vsyncadd %s242, %s248
          %s250 = smul.addr %s246, 2
          %s251 = smul.addr %s28, 32
          %s252 = sadd.s32 %s250, %s251
          %s253 = smul.addr %s252, 128
          %s254 = scalar_lea.hbm %s0, %s253
          %s255 = sshll.u32 %s245, 4
          %s256 = int_to_ptr.vmem [resolvable:$true] %s255
          %261 = dma.hbm_to_vmem [thread:$0]  %s254, 2048, %s256, %s242, 128, 128, 8
        $region28: #{tpu_custom_call.1} parent=23 // pred_fallthru
          _
        // Predicated region
        $region29: #{tpu_custom_call.1} parent=23 // pred_check
          %p262 = pneg %p91
        $region30: #{tpu_custom_call.1} parent=23 // pred_check_branch
          %264 = sbr.rel (%p262) target = $region32
        $region31: #{tpu_custom_call.1} parent=23 // pred_region
          %s265 = sand.u32 %s21, 1
          %s266 = scalar_lea.sflag [#allocation6], %s265
          %s267 = sand.u32 %s81, 1
          %s268 = smul.addr %s267, 16
          %s269 = scalar_lea.vmem [#allocation5], %s268
          %s270 = smul.u32 %s29, 8
          %s271 = ssub.s32 %s270, 1
          %p272 = scmp.gt.s32.totalorder %s271, 0
          %s273 = scalar_select %p272, %s271, 0
          %s275 = ssub.s32 256, 256
          %276 = vsyncadd %s266, %s275
          %s277 = smul.addr %s273, 2
          %s278 = smul.addr %s28, 32
          %s279 = sadd.s32 %s277, %s278
          %s280 = smul.addr %s279, 128
          %s281 = scalar_lea.hbm %s1, %s280
          %s282 = sshll.u32 %s269, 4
          %s283 = int_to_ptr.vmem [resolvable:$true] %s282
          %288 = dma.hbm_to_vmem [thread:$0]  %s281, 256, %s283, %s266, 128, 128, 8
        $region32: #{tpu_custom_call.1} parent=23 // pred_fallthru
          _
        // Predicated region
        $region33: #{tpu_custom_call.1} parent=23 // pred_check
          %p289 = pneg %p127
        $region34: #{tpu_custom_call.1} parent=23 // pred_check_branch
          %291 = sbr.rel (%p289) target = $region36
        $region35: #{tpu_custom_call.1} parent=23 // pred_region
          %s292 = sand.u32 %s21, 1
          %s293 = scalar_lea.sflag [#allocation6], %s292
          %s294 = sand.u32 %s117, 1
          %s295 = smul.addr %s294, 16
          %s296 = scalar_lea.vmem [#allocation7], %s295
          %s297 = smul.u32 %s29, 8
          %s298 = sadd.s32 %s297, 8
          %p299 = scmp.lt.s32.totalorder %s298, 15
          %s300 = scalar_select %p299, %s298, 15
          %s302 = ssub.s32 256, 256
          %303 = vsyncadd %s293, %s302
          %s304 = smul.addr %s300, 2
          %s305 = smul.addr %s28, 32
          %s306 = sadd.s32 %s304, %s305
          %s307 = smul.addr %s306, 128
          %s308 = scalar_lea.hbm %s2, %s307
          %s309 = sshll.u32 %s296, 4
          %s310 = int_to_ptr.vmem [resolvable:$true] %s309
          %315 = dma.hbm_to_vmem [thread:$0]  %s308, 256, %s310, %s293, 128, 128, 8
        $region36: #{tpu_custom_call.1} parent=23 // pred_fallthru
          _
      $region24: #{tpu_custom_call.1} parent=5 // pred_fallthru
        _
      %p316 = scmp.le.s32.totalorder 1, %s21
      %p317 = scmp.lt.s32.totalorder %s21, 5
      %p318 = pnand %p316, %p317
      %p319 = pneg %p318
      // Predicated region
      $region37: #{tpu_custom_call.1} parent=5 // pred_check
        _
      $region38: #{tpu_custom_call.1} parent=5 // pred_check_branch
        %321 = sbr.rel (%p318) target = $region40
      $region39: #{tpu_custom_call.1} parent=5 // pred_region
        %s322 = ssub.s32 %s21, 1
        %s323 = sand.u32 %s48, 1
        %s324 = scalar_lea.sflag [#allocation3], %s323
        %s325 = sand.u32 %s48, 1
        %s326 = smul.addr %s325, 128
        %s327 = scalar_lea.vmem [#allocation2], %s326
        // Predicated region
        $region41: #{tpu_custom_call.1} parent=39 // pred_check
          %p328 = pneg %p61
        $region42: #{tpu_custom_call.1} parent=39 // pred_check_branch
          %330 = sbr.rel (%p328) target = $region44
        $region43: #{tpu_custom_call.1} parent=39 // pred_region
          %331 = dma.done %s324, 2048
        $region44: #{tpu_custom_call.1} parent=39 // pred_fallthru
          _
        %s332 = sand.u32 %s26, 1
        %s333 = scalar_lea.sflag [#allocation6], %s332
        %s334 = sand.u32 %s84, 1
        %s335 = smul.addr %s334, 16
        %s336 = scalar_lea.vmem [#allocation5], %s335
        // Predicated region
        $region45: #{tpu_custom_call.1} parent=39 // pred_check
          %p337 = pneg %p97
        $region46: #{tpu_custom_call.1} parent=39 // pred_check_branch
          %339 = sbr.rel (%p337) target = $region48
        $region47: #{tpu_custom_call.1} parent=39 // pred_region
          %340 = dma.done %s333, 256
        $region48: #{tpu_custom_call.1} parent=39 // pred_fallthru
          _
        %s341 = sand.u32 %s26, 1
        %s342 = scalar_lea.sflag [#allocation6], %s341
        %s343 = sand.u32 %s120, 1
        %s344 = smul.addr %s343, 16
        %s345 = scalar_lea.vmem [#allocation7], %s344
        // Predicated region
        $region49: #{tpu_custom_call.1} parent=39 // pred_check
          %p346 = pneg %p133
        $region50: #{tpu_custom_call.1} parent=39 // pred_check_branch
          %348 = sbr.rel (%p346) target = $region52
        $region51: #{tpu_custom_call.1} parent=39 // pred_region
          %349 = dma.done %s342, 256
        $region52: #{tpu_custom_call.1} parent=39 // pred_fallthru
          _
        // Predicated region
        $region53: #{tpu_custom_call.1} parent=39 // pred_check
          %p350 = pneg %p154
        $region54: #{tpu_custom_call.1} parent=39 // pred_check_branch
          %352 = sbr.rel (%p350) target = $region56
        $region55: #{tpu_custom_call.1} parent=39 // pred_region
          %353 = dma.done [#allocation9], 256
        $region56: #{tpu_custom_call.1} parent=39 // pred_fallthru
          _
        %s354 = sand.u32 %s48, 1
        %s355 = scalar_lea.sflag [#allocation3], %s354
        %s356 = sand.u32 %s48, 1
        %s357 = smul.addr %s356, 128
        %s358 = scalar_lea.vmem [#allocation2], %s357
        %p359 = pneg %p61
        %p360 = pneg %p58
        %s361 = sand.u32 %s26, 1
        %s362 = scalar_lea.sflag [#allocation6], %s361
        %s363 = sand.u32 %s84, 1
        %s364 = smul.addr %s363, 16
        %s365 = scalar_lea.vmem [#allocation5], %s364
        %p366 = pneg %p97
        %p367 = pneg %p94
        %s368 = sand.u32 %s26, 1
        %s369 = scalar_lea.sflag [#allocation6], %s368
        %s370 = sand.u32 %s120, 1
        %s371 = smul.addr %s370, 16
        %s372 = scalar_lea.vmem [#allocation7], %s371
        %p373 = pneg %p133
        %p374 = pneg %p130
        %p375 = pneg %p154
        %p376 = pneg %p151
        %p377 = pneg %p175
        %p378 = pneg %p172
        %p379 = pneg %p203
        %p380 = pneg %p200
        %s381 = sand.u32 %s190, 1
        %s382 = scalar_lea.sflag [#allocation4], %s381
        %s383 = sand.u32 %s190, 1
        %s384 = smul.addr %s383, 128
        %s385 = scalar_lea.vmem [#allocation10], %s384
        %s386 = smul.u32 8, %s31
        %s387 = smul.u32 %s31, 8
        %s388 = ssub.s32 %s387, 1
        %p389 = scmp.gt.s32.totalorder %s388, 0
        %s390 = scalar_select %p389, %s388, 0
        %s391 = smul.u32 %s31, 8
        %s392 = sadd.s32 %s391, 8
        %p393 = scmp.lt.s32.totalorder %s392, 15
        %s394 = scalar_select %p393, %s392, 15
        %s395 = smul.u32 8, %s31
        %v396 = vld [vmem:[%s327] sm:$0xff]
        %v397 = vld [vmem:[%s327 + $0x8] sm:$0xff]
        %v398 = vld [vmem:[%s327 + $0x10] sm:$0xff]
        %v399 = vld [vmem:[%s327 + $0x18] sm:$0xff]
        %v400 = vld [vmem:[%s327 + $0x20] sm:$0xff]
        %v401 = vld [vmem:[%s327 + $0x28] sm:$0xff]
        %v402 = vld [vmem:[%s327 + $0x30] sm:$0xff]
        %v403 = vld [vmem:[%s327 + $0x38] sm:$0xff]
        %v404 = vld [vmem:[%s327 + $0x40] sm:$0xff]
        %v405 = vld [vmem:[%s327 + $0x48] sm:$0xff]
        %v406 = vld [vmem:[%s327 + $0x50] sm:$0xff]
        %v407 = vld [vmem:[%s327 + $0x58] sm:$0xff]
        %v408 = vld [vmem:[%s327 + $0x60] sm:$0xff]
        %v409 = vld [vmem:[%s327 + $0x68] sm:$0xff]
        %v410 = vld [vmem:[%s327 + $0x70] sm:$0xff]
        %v411 = vld [vmem:[%s327 + $0x78] sm:$0xff]
        %v412 = vld [vmem:[%s336] sm:$0xff]
        %v413 = vld [vmem:[%s336 + $0x8] sm:$0xff]
        %v414 = vld [vmem:[%s345] sm:$0xff]
        %v415 = vld [vmem:[%s345 + $0x8] sm:$0xff]
        %p416 = scmp.gt.s32.totalorder %s31, 0
        %s417 = scalar_select %p416, 1.0, 0.0
        %v418 = vstv %s417
        %v419 = vmul.f32 %v412, %v418
        %v420 = vmul.f32 %v413, %v418
        %p421 = scmp.lt.s32.totalorder %s31, 1
        %s422 = scalar_select %p421, 1.0, 0.0
        %v423 = vstv %s422
        %v424 = vmul.f32 %v414, %v423
        %v425 = vmul.f32 %v415, %v423
        %v426 = vlaneseq
        %v427 = vshrl.u32 %v426, 7
        %v428 = vadd.s32 %v427, 8
        %vm429 = vcmp.ge.s32.totalorder %v427, 1
        %vm430 = vcmp.ge.s32.totalorder %v428, 1
        %vm431 = vcmp.le.s32.totalorder %v427, 14
        %vm432 = vcmp.le.s32.totalorder %v428, 14
        %v433 = vrot.slane %v419, 7
        %v434 = vrot.slane %v420, 7
        %v435 = vrot.slane %v396, 7
        %v436 = vrot.slane %v397, 7
        %v437 = vrot.slane %v398, 7
        %v438 = vrot.slane %v399, 7
        %v439 = vrot.slane %v400, 7
        %v440 = vrot.slane %v401, 7
        %v441 = vrot.slane %v402, 7
        %v442 = vrot.slane %v403, 7
        %v443 = vrot.slane %v404, 7
        %v444 = vrot.slane %v405, 7
        %v445 = vrot.slane %v406, 7
        %v446 = vrot.slane %v407, 7
        %v447 = vrot.slane %v408, 7
        %v448 = vrot.slane %v409, 7
        %v449 = vrot.slane %v410, 7
        %v450 = vrot.slane %v411, 7
        %v451 = vrot.slane %v424, 7
        %v452 = vrot.slane %v425, 7
        %vm453 = vcmp.lt.s32.totalorder %v427, 1
        %v454 = vsel %vm453, %v451, %v452
        %v455 = vsel %vm453, %v450, %v451
        %v456 = vsel %vm453, %v449, %v450
        %v457 = vsel %vm453, %v448, %v449
        %v458 = vsel %vm453, %v447, %v448
        %v459 = vsel %vm453, %v446, %v447
        %v460 = vsel %vm453, %v445, %v446
        %v461 = vsel %vm453, %v444, %v445
        %v462 = vsel %vm453, %v443, %v444
        %v463 = vsel %vm453, %v442, %v443
        %v464 = vsel %vm453, %v441, %v442
        %v465 = vsel %vm453, %v440, %v441
        %v466 = vsel %vm453, %v439, %v440
        %v467 = vsel %vm453, %v438, %v439
        %v468 = vsel %vm453, %v437, %v438
        %v469 = vsel %vm453, %v436, %v437
        %v470 = vsel %vm453, %v435, %v436
        %v471 = vsel %vm453, %v434, %v435
        %v472 = vsel %vm453, %v433, %v434
        %v473 = vsel %vm453, %v452, %v433
        %v474 = vsel %vm429, 1, 0
        %v475 = vsel %vm430, 1, 0
        %vm476 = vcmp.eq.s32.totalorder %v474, 1
        %vm477 = vcmp.eq.s32.totalorder %v475, 1
        %v478 = vsel %vm476, %v473, 0.0
        %v479 = vsel %vm477, %v472, 0.0
        %v480 = vsel %vm476, %v471, 0.0
        %v481 = vsel %vm477, %v470, 0.0
        %v482 = vsel %vm476, %v469, 0.0
        %v483 = vsel %vm477, %v468, 0.0
        %v484 = vsel %vm476, %v467, 0.0
        %v485 = vsel %vm477, %v466, 0.0
        %v486 = vsel %vm476, %v465, 0.0
        %v487 = vsel %vm477, %v464, 0.0
        %v488 = vsel %vm476, %v463, 0.0
        %v489 = vsel %vm477, %v462, 0.0
        %v490 = vsel %vm476, %v461, 0.0
        %v491 = vsel %vm477, %v460, 0.0
        %v492 = vsel %vm476, %v459, 0.0
        %v493 = vsel %vm477, %v458, 0.0
        %v494 = vsel %vm476, %v457, 0.0
        %v495 = vsel %vm477, %v456, 0.0
        %v496 = vsel %vm476, %v455, 0.0
        %v497 = vsel %vm477, %v454, 0.0
        %v498 = vrot.slane %v419, 1
        %v499 = vrot.slane %v420, 1
        %v500 = vrot.slane %v396, 1
        %v501 = vrot.slane %v397, 1
        %v502 = vrot.slane %v398, 1
        %v503 = vrot.slane %v399, 1
        %v504 = vrot.slane %v400, 1
        %v505 = vrot.slane %v401, 1
        %v506 = vrot.slane %v402, 1
        %v507 = vrot.slane %v403, 1
        %v508 = vrot.slane %v404, 1
        %v509 = vrot.slane %v405, 1
        %v510 = vrot.slane %v406, 1
        %v511 = vrot.slane %v407, 1
        %v512 = vrot.slane %v408, 1
        %v513 = vrot.slane %v409, 1
        %v514 = vrot.slane %v410, 1
        %v515 = vrot.slane %v411, 1
        %v516 = vrot.slane %v424, 1
        %v517 = vrot.slane %v425, 1
        %vm518 = vcmp.lt.s32.totalorder %v427, 7
        %v519 = vsel %vm518, %v516, %v517
        %v520 = vsel %vm518, %v515, %v516
        %v521 = vsel %vm518, %v514, %v515
        %v522 = vsel %vm518, %v513, %v514
        %v523 = vsel %vm518, %v512, %v513
        %v524 = vsel %vm518, %v511, %v512
        %v525 = vsel %vm518, %v510, %v511
        %v526 = vsel %vm518, %v509, %v510
        %v527 = vsel %vm518, %v508, %v509
        %v528 = vsel %vm518, %v507, %v508
        %v529 = vsel %vm518, %v506, %v507
        %v530 = vsel %vm518, %v505, %v506
        %v531 = vsel %vm518, %v504, %v505
        %v532 = vsel %vm518, %v503, %v504
        %v533 = vsel %vm518, %v502, %v503
        %v534 = vsel %vm518, %v501, %v502
        %v535 = vsel %vm518, %v500, %v501
        %v536 = vsel %vm518, %v499, %v500
        %v537 = vsel %vm518, %v498, %v499
        %v538 = vsel %vm518, %v517, %v498
        %v539 = vsel %vm431, 1, 0
        %v540 = vsel %vm432, 1, 0
        %vm541 = vcmp.eq.s32.totalorder %v539, 1
        %vm542 = vcmp.eq.s32.totalorder %v540, 1
        %v543 = vsel %vm541, %v537, 0.0
        %v544 = vsel %vm542, %v536, 0.0
        %v545 = vsel %vm541, %v535, 0.0
        %v546 = vsel %vm542, %v534, 0.0
        %v547 = vsel %vm541, %v533, 0.0
        %v548 = vsel %vm542, %v532, 0.0
        %v549 = vsel %vm541, %v531, 0.0
        %v550 = vsel %vm542, %v530, 0.0
        %v551 = vsel %vm541, %v529, 0.0
        %v552 = vsel %vm542, %v528, 0.0
        %v553 = vsel %vm541, %v527, 0.0
        %v554 = vsel %vm542, %v526, 0.0
        %v555 = vsel %vm541, %v525, 0.0
        %v556 = vsel %vm542, %v524, 0.0
        %v557 = vsel %vm541, %v523, 0.0
        %v558 = vsel %vm542, %v522, 0.0
        %v559 = vsel %vm541, %v521, 0.0
        %v560 = vsel %vm542, %v520, 0.0
        %v561 = vsel %vm541, %v519, 0.0
        %v562 = vsel %vm542, %v538, 0.0
        %v563 = vld [vmem:[#allocation8] sm:$0xff]
        %v564 = vld [vmem:[#allocation8 + $0x8] sm:$0x1]
        %v565 = vld [vmem:[%s4] sm:$0x1]
        %v567 = vlaneseq
        %v568 = vshrl.u32 %v567, 7
        %v569 = vsub.s32 0, %v568
        %v570 = vrot.slane %v565, %v569
        %v572 = vlaneseq
        %v573 = vshrl.u32 %v572, 7
        %v574 = vsub.s32 0, %v573
        %v575 = vrot.slane %v563, %v574
        %v576 = vmul.f32 %v478, %v575
        %v577 = vmul.f32 %v479, %v575
        %v578 = vmul.f32 %v480, %v575
        %v579 = vmul.f32 %v481, %v575
        %v580 = vmul.f32 %v482, %v575
        %v581 = vmul.f32 %v483, %v575
        %v582 = vmul.f32 %v484, %v575
        %v583 = vmul.f32 %v485, %v575
        %v584 = vmul.f32 %v486, %v575
        %v585 = vmul.f32 %v487, %v575
        %v586 = vmul.f32 %v488, %v575
        %v587 = vmul.f32 %v489, %v575
        %v588 = vmul.f32 %v490, %v575
        %v589 = vmul.f32 %v491, %v575
        %v590 = vmul.f32 %v492, %v575
        %v591 = vmul.f32 %v493, %v575
        %v592 = vadd.f32 %v570, %v576
        %v593 = vadd.f32 %v570, %v577
        %v594 = vadd.f32 %v570, %v578
        %v595 = vadd.f32 %v570, %v579
        %v596 = vadd.f32 %v570, %v580
        %v597 = vadd.f32 %v570, %v581
        %v598 = vadd.f32 %v570, %v582
        %v599 = vadd.f32 %v570, %v583
        %v600 = vadd.f32 %v570, %v584
        %v601 = vadd.f32 %v570, %v585
        %v602 = vadd.f32 %v570, %v586
        %v603 = vadd.f32 %v570, %v587
        %v604 = vadd.f32 %v570, %v588
        %v605 = vadd.f32 %v570, %v589
        %v606 = vadd.f32 %v570, %v590
        %v607 = vadd.f32 %v570, %v591
        %v608 = vlaneseq
        %v609 = vshrl.u32 %v608, 7
        %v610 = vsub.s32 1, %v609
        %v611 = vrot.slane %v563, %v610
        %v612 = vmul.f32 %v419, %v611
        %v613 = vmul.f32 %v420, %v611
        %v614 = vmul.f32 %v396, %v611
        %v615 = vmul.f32 %v397, %v611
        %v616 = vmul.f32 %v398, %v611
        %v617 = vmul.f32 %v399, %v611
        %v618 = vmul.f32 %v400, %v611
        %v619 = vmul.f32 %v401, %v611
        %v620 = vmul.f32 %v402, %v611
        %v621 = vmul.f32 %v403, %v611
        %v622 = vmul.f32 %v404, %v611
        %v623 = vmul.f32 %v405, %v611
        %v624 = vmul.f32 %v406, %v611
        %v625 = vmul.f32 %v407, %v611
        %v626 = vmul.f32 %v408, %v611
        %v627 = vmul.f32 %v409, %v611
        %v628 = vadd.f32 %v592, %v612
        %v629 = vadd.f32 %v593, %v613
        %v630 = vadd.f32 %v594, %v614
        %v631 = vadd.f32 %v595, %v615
        %v632 = vadd.f32 %v596, %v616
        %v633 = vadd.f32 %v597, %v617
        %v634 = vadd.f32 %v598, %v618
        %v635 = vadd.f32 %v599, %v619
        %v636 = vadd.f32 %v600, %v620
        %v637 = vadd.f32 %v601, %v621
        %v638 = vadd.f32 %v602, %v622
        %v639 = vadd.f32 %v603, %v623
        %v640 = vadd.f32 %v604, %v624
        %v641 = vadd.f32 %v605, %v625
        %v642 = vadd.f32 %v606, %v626
        %v643 = vadd.f32 %v607, %v627
        %v644 = vlaneseq
        %v645 = vshrl.u32 %v644, 7
        %v646 = vsub.s32 2, %v645
        %v647 = vrot.slane %v563, %v646
        %v648 = vmul.f32 %v543, %v647
        %v649 = vmul.f32 %v544, %v647
        %v650 = vmul.f32 %v545, %v647
        %v651 = vmul.f32 %v546, %v647
        %v652 = vmul.f32 %v547, %v647
        %v653 = vmul.f32 %v548, %v647
        %v654 = vmul.f32 %v549, %v647
        %v655 = vmul.f32 %v550, %v647
        %v656 = vmul.f32 %v551, %v647
        %v657 = vmul.f32 %v552, %v647
        %v658 = vmul.f32 %v553, %v647
        %v659 = vmul.f32 %v554, %v647
        %v660 = vmul.f32 %v555, %v647
        %v661 = vmul.f32 %v556, %v647
        %v662 = vmul.f32 %v557, %v647
        %v663 = vmul.f32 %v558, %v647
        %v664 = vadd.f32 %v628, %v648
        %v665 = vadd.f32 %v629, %v649
        %v666 = vadd.f32 %v630, %v650
        %v667 = vadd.f32 %v631, %v651
        %v668 = vadd.f32 %v632, %v652
        %v669 = vadd.f32 %v633, %v653
        %v670 = vadd.f32 %v634, %v654
        %v671 = vadd.f32 %v635, %v655
        %v672 = vadd.f32 %v636, %v656
        %v673 = vadd.f32 %v637, %v657
        %v674 = vadd.f32 %v638, %v658
        %v675 = vadd.f32 %v639, %v659
        %v676 = vadd.f32 %v640, %v660
        %v677 = vadd.f32 %v641, %v661
        %v678 = vadd.f32 %v642, %v662
        %v679 = vadd.f32 %v643, %v663
        %v680 = vlaneseq
        %v681 = vshrl.u32 %v680, 7
        %v682 = vsub.s32 3, %v681
        %v683 = vrot.slane %v563, %v682
        %v684 = vmul.f32 %v480, %v683
        %v685 = vmul.f32 %v481, %v683
        %v686 = vmul.f32 %v482, %v683
        %v687 = vmul.f32 %v483, %v683
        %v688 = vmul.f32 %v484, %v683
        %v689 = vmul.f32 %v485, %v683
        %v690 = vmul.f32 %v486, %v683
        %v691 = vmul.f32 %v487, %v683
        %v692 = vmul.f32 %v488, %v683
        %v693 = vmul.f32 %v489, %v683
        %v694 = vmul.f32 %v490, %v683
        %v695 = vmul.f32 %v491, %v683
        %v696 = vmul.f32 %v492, %v683
        %v697 = vmul.f32 %v493, %v683
        %v698 = vmul.f32 %v494, %v683
        %v699 = vmul.f32 %v495, %v683
        %v700 = vadd.f32 %v664, %v684
        %v701 = vadd.f32 %v665, %v685
        %v702 = vadd.f32 %v666, %v686
        %v703 = vadd.f32 %v667, %v687
        %v704 = vadd.f32 %v668, %v688
        %v705 = vadd.f32 %v669, %v689
        %v706 = vadd.f32 %v670, %v690
        %v707 = vadd.f32 %v671, %v691
        %v708 = vadd.f32 %v672, %v692
        %v709 = vadd.f32 %v673, %v693
        %v710 = vadd.f32 %v674, %v694
        %v711 = vadd.f32 %v675, %v695
        %v712 = vadd.f32 %v676, %v696
        %v713 = vadd.f32 %v677, %v697
        %v714 = vadd.f32 %v678, %v698
        %v715 = vadd.f32 %v679, %v699
        %v716 = vlaneseq
        %v717 = vshrl.u32 %v716, 7
        %v718 = vsub.s32 4, %v717
        %v719 = vrot.slane %v563, %v718
        %v720 = vmul.f32 %v396, %v719
        %v721 = vmul.f32 %v397, %v719
        %v722 = vmul.f32 %v398, %v719
        %v723 = vmul.f32 %v399, %v719
        %v724 = vmul.f32 %v400, %v719
        %v725 = vmul.f32 %v401, %v719
        %v726 = vmul.f32 %v402, %v719
        %v727 = vmul.f32 %v403, %v719
        %v728 = vmul.f32 %v404, %v719
        %v729 = vmul.f32 %v405, %v719
        %v730 = vmul.f32 %v406, %v719
        %v731 = vmul.f32 %v407, %v719
        %v732 = vmul.f32 %v408, %v719
        %v733 = vmul.f32 %v409, %v719
        %v734 = vmul.f32 %v410, %v719
        %v735 = vmul.f32 %v411, %v719
        %v736 = vadd.f32 %v700, %v720
        %v737 = vadd.f32 %v701, %v721
        %v738 = vadd.f32 %v702, %v722
        %v739 = vadd.f32 %v703, %v723
        %v740 = vadd.f32 %v704, %v724
        %v741 = vadd.f32 %v705, %v725
        %v742 = vadd.f32 %v706, %v726
        %v743 = vadd.f32 %v707, %v727
        %v744 = vadd.f32 %v708, %v728
        %v745 = vadd.f32 %v709, %v729
        %v746 = vadd.f32 %v710, %v730
        %v747 = vadd.f32 %v711, %v731
        %v748 = vadd.f32 %v712, %v732
        %v749 = vadd.f32 %v713, %v733
        %v750 = vadd.f32 %v714, %v734
        %v751 = vadd.f32 %v715, %v735
        %v752 = vlaneseq
        %v753 = vshrl.u32 %v752, 7
        %v754 = vsub.s32 5, %v753
        %v755 = vrot.slane %v563, %v754
        %v756 = vmul.f32 %v545, %v755
        %v757 = vmul.f32 %v546, %v755
        %v758 = vmul.f32 %v547, %v755
        %v759 = vmul.f32 %v548, %v755
        %v760 = vmul.f32 %v549, %v755
        %v761 = vmul.f32 %v550, %v755
        %v762 = vmul.f32 %v551, %v755
        %v763 = vmul.f32 %v552, %v755
        %v764 = vmul.f32 %v553, %v755
        %v765 = vmul.f32 %v554, %v755
        %v766 = vmul.f32 %v555, %v755
        %v767 = vmul.f32 %v556, %v755
        %v768 = vmul.f32 %v557, %v755
        %v769 = vmul.f32 %v558, %v755
        %v770 = vmul.f32 %v559, %v755
        %v771 = vmul.f32 %v560, %v755
        %v772 = vadd.f32 %v736, %v756
        %v773 = vadd.f32 %v737, %v757
        %v774 = vadd.f32 %v738, %v758
        %v775 = vadd.f32 %v739, %v759
        %v776 = vadd.f32 %v740, %v760
        %v777 = vadd.f32 %v741, %v761
        %v778 = vadd.f32 %v742, %v762
        %v779 = vadd.f32 %v743, %v763
        %v780 = vadd.f32 %v744, %v764
        %v781 = vadd.f32 %v745, %v765
        %v782 = vadd.f32 %v746, %v766
        %v783 = vadd.f32 %v747, %v767
        %v784 = vadd.f32 %v748, %v768
        %v785 = vadd.f32 %v749, %v769
        %v786 = vadd.f32 %v750, %v770
        %v787 = vadd.f32 %v751, %v771
        %v788 = vlaneseq
        %v789 = vshrl.u32 %v788, 7
        %v790 = vsub.s32 6, %v789
        %v791 = vrot.slane %v563, %v790
        %v792 = vmul.f32 %v482, %v791
        %v793 = vmul.f32 %v483, %v791
        %v794 = vmul.f32 %v484, %v791
        %v795 = vmul.f32 %v485, %v791
        %v796 = vmul.f32 %v486, %v791
        %v797 = vmul.f32 %v487, %v791
        %v798 = vmul.f32 %v488, %v791
        %v799 = vmul.f32 %v489, %v791
        %v800 = vmul.f32 %v490, %v791
        %v801 = vmul.f32 %v491, %v791
        %v802 = vmul.f32 %v492, %v791
        %v803 = vmul.f32 %v493, %v791
        %v804 = vmul.f32 %v494, %v791
        %v805 = vmul.f32 %v495, %v791
        %v806 = vmul.f32 %v496, %v791
        %v807 = vmul.f32 %v497, %v791
        %v808 = vadd.f32 %v772, %v792
        %v809 = vadd.f32 %v773, %v793
        %v810 = vadd.f32 %v774, %v794
        %v811 = vadd.f32 %v775, %v795
        %v812 = vadd.f32 %v776, %v796
        %v813 = vadd.f32 %v777, %v797
        %v814 = vadd.f32 %v778, %v798
        %v815 = vadd.f32 %v779, %v799
        %v816 = vadd.f32 %v780, %v800
        %v817 = vadd.f32 %v781, %v801
        %v818 = vadd.f32 %v782, %v802
        %v819 = vadd.f32 %v783, %v803
        %v820 = vadd.f32 %v784, %v804
        %v821 = vadd.f32 %v785, %v805
        %v822 = vadd.f32 %v786, %v806
        %v823 = vadd.f32 %v787, %v807
        %v824 = vlaneseq
        %v825 = vshrl.u32 %v824, 7
        %v826 = vsub.s32 7, %v825
        %v827 = vrot.slane %v563, %v826
        %v828 = vmul.f32 %v398, %v827
        %v829 = vmul.f32 %v399, %v827
        %v830 = vmul.f32 %v400, %v827
        %v831 = vmul.f32 %v401, %v827
        %v832 = vmul.f32 %v402, %v827
        %v833 = vmul.f32 %v403, %v827
        %v834 = vmul.f32 %v404, %v827
        %v835 = vmul.f32 %v405, %v827
        %v836 = vmul.f32 %v406, %v827
        %v837 = vmul.f32 %v407, %v827
        %v838 = vmul.f32 %v408, %v827
        %v839 = vmul.f32 %v409, %v827
        %v840 = vmul.f32 %v410, %v827
        %v841 = vmul.f32 %v411, %v827
        %v842 = vmul.f32 %v424, %v827
        %v843 = vmul.f32 %v425, %v827
        %v844 = vadd.f32 %v808, %v828
        %v845 = vadd.f32 %v809, %v829
        %v846 = vadd.f32 %v810, %v830
        %v847 = vadd.f32 %v811, %v831
        %v848 = vadd.f32 %v812, %v832
        %v849 = vadd.f32 %v813, %v833
        %v850 = vadd.f32 %v814, %v834
        %v851 = vadd.f32 %v815, %v835
        %v852 = vadd.f32 %v816, %v836
        %v853 = vadd.f32 %v817, %v837
        %v854 = vadd.f32 %v818, %v838
        %v855 = vadd.f32 %v819, %v839
        %v856 = vadd.f32 %v820, %v840
        %v857 = vadd.f32 %v821, %v841
        %v858 = vadd.f32 %v822, %v842
        %v859 = vadd.f32 %v823, %v843
        %v860 = vlaneseq
        %v861 = vshrl.u32 %v860, 7
        %v862 = vsub.s32 0, %v861
        %v863 = vrot.slane %v564, %v862
        %v864 = vmul.f32 %v547, %v863
        %v865 = vmul.f32 %v548, %v863
        %v866 = vmul.f32 %v549, %v863
        %v867 = vmul.f32 %v550, %v863
        %v868 = vmul.f32 %v551, %v863
        %v869 = vmul.f32 %v552, %v863
        %v870 = vmul.f32 %v553, %v863
        %v871 = vmul.f32 %v554, %v863
        %v872 = vmul.f32 %v555, %v863
        %v873 = vmul.f32 %v556, %v863
        %v874 = vmul.f32 %v557, %v863
        %v875 = vmul.f32 %v558, %v863
        %v876 = vmul.f32 %v559, %v863
        %v877 = vmul.f32 %v560, %v863
        %v878 = vmul.f32 %v561, %v863
        %v879 = vmul.f32 %v562, %v863
        %v880 = vadd.f32 %v844, %v864
        %v881 = vadd.f32 %v845, %v865
        %v882 = vadd.f32 %v846, %v866
        %v883 = vadd.f32 %v847, %v867
        %v884 = vadd.f32 %v848, %v868
        %v885 = vadd.f32 %v849, %v869
        %v886 = vadd.f32 %v850, %v870
        %v887 = vadd.f32 %v851, %v871
        %v888 = vadd.f32 %v852, %v872
        %v889 = vadd.f32 %v853, %v873
        %v890 = vadd.f32 %v854, %v874
        %v891 = vadd.f32 %v855, %v875
        %v892 = vadd.f32 %v856, %v876
        %v893 = vadd.f32 %v857, %v877
        %v894 = vadd.f32 %v858, %v878
        %v895 = vadd.f32 %v859, %v879
        %896 = vst [vmem:[%s385] sm:$0xff] %v880
        %897 = vst [vmem:[%s385 + $0x8] sm:$0xff] %v881
        %898 = vst [vmem:[%s385 + $0x10] sm:$0xff] %v882
        %899 = vst [vmem:[%s385 + $0x18] sm:$0xff] %v883
        %900 = vst [vmem:[%s385 + $0x20] sm:$0xff] %v884
        %901 = vst [vmem:[%s385 + $0x28] sm:$0xff] %v885
        %902 = vst [vmem:[%s385 + $0x30] sm:$0xff] %v886
        %903 = vst [vmem:[%s385 + $0x38] sm:$0xff] %v887
        %904 = vst [vmem:[%s385 + $0x40] sm:$0xff] %v888
        %905 = vst [vmem:[%s385 + $0x48] sm:$0xff] %v889
        %906 = vst [vmem:[%s385 + $0x50] sm:$0xff] %v890
        %907 = vst [vmem:[%s385 + $0x58] sm:$0xff] %v891
        %908 = vst [vmem:[%s385 + $0x60] sm:$0xff] %v892
        %909 = vst [vmem:[%s385 + $0x68] sm:$0xff] %v893
        %910 = vst [vmem:[%s385 + $0x70] sm:$0xff] %v894
        %911 = vst [vmem:[%s385 + $0x78] sm:$0xff] %v895
        %s912 = sand.u32 %s190, 1
        %s913 = scalar_lea.sflag [#allocation4], %s912
        %s914 = sand.u32 %s190, 1
        %s915 = smul.addr %s914, 128
        %s916 = scalar_lea.vmem [#allocation10], %s915
        // Predicated region
        $region57: #{tpu_custom_call.1} parent=39 // pred_check
          %p917 = pneg %p200
        $region58: #{tpu_custom_call.1} parent=39 // pred_check_branch
          %919 = sbr.rel (%p917) target = $region60
        $region59: #{tpu_custom_call.1} parent=39 // pred_region
          %s920 = smul.u32 8, %s31
          %s922 = ssub.s32 2048, 2048
          %923 = vsyncadd %s913, %s922
          %s924 = smul.addr %s920, 2
          %s925 = smul.addr %s30, 32
          %s926 = sadd.s32 %s924, %s925
          %s927 = smul.addr %s926, 128
          %s928 = scalar_lea.hbm %s5, %s927
          %s929 = sshll.u32 %s916, 4
          %s930 = int_to_ptr.vmem [resolvable:$true] %s929
          %935 = dma.vmem_to_hbm [thread:$0]  %s930, 2048, %s928, %s913, 128, 128, 8
        $region60: #{tpu_custom_call.1} parent=39 // pred_fallthru
          _
      $region40: #{tpu_custom_call.1} parent=5 // pred_fallthru
        _
      %p936 = scmp.le.s32.totalorder 2, %s21
      // Predicated region
      $region61: #{tpu_custom_call.1} parent=5 // pred_check
        %p937 = pneg %p936
      $region62: #{tpu_custom_call.1} parent=5 // pred_check_branch
        %939 = sbr.rel (%p937) target = $region64
      $region63: #{tpu_custom_call.1} parent=5 // pred_region
        %s940 = ssub.s32 %s21, 2
        // Predicated region
        $region65: #{tpu_custom_call.1} parent=63 // pred_check
          %p941 = pneg %p206
        $region66: #{tpu_custom_call.1} parent=63 // pred_check_branch
          %943 = sbr.rel (%p941) target = $region68
        $region67: #{tpu_custom_call.1} parent=63 // pred_region
          %s944 = sand.u32 %s191, 1
          %s945 = scalar_lea.sflag [#allocation4], %s944
          %s946 = sand.u32 %s191, 1
          %s947 = smul.addr %s946, 128
          %s948 = scalar_lea.vmem [#allocation10], %s947
          %949 = dma.done %s945, 2048
        $region68: #{tpu_custom_call.1} parent=63 // pred_fallthru
          _
      $region64: #{tpu_custom_call.1} parent=5 // pred_fallthru
        _
    $region6: #{tpu_custom_call.1} parent=1 // loop_footer
      %s25 = sadd.s32 1, %s21
    $region7: #{tpu_custom_call.1} parent=1 // loop_footer_branch
      %20 = sbr.rel target = $region3
    $region8: #{tpu_custom_call.1} parent=1 // loop_exit
      _
    %950 = vsyncpa [#allocation3], 1
    %s951 = scalar_lea.sflag [#allocation3], 1
    %952 = vsyncpa %s951, 1
    %953 = vsyncpa [#allocation6], 1
    %s954 = scalar_lea.sflag [#allocation6], 1
    %955 = vsyncpa %s954, 1
    %956 = vsyncpa [#allocation9], 1
    %957 = vsyncpa [#allocation4], 1
    %s958 = scalar_lea.sflag [#allocation4], 1
    %959 = vsyncpa %s958, 1

</llo_original>
